<compile_context>
chip_gen: v5e
topology: v5e:2x2
jax: 0.10.0
libtpu: 0.0.40
codegen_flags: <defaults>
</compile_context>

<pallas_src>
import math

import numpy as np
import jax
import jax.numpy as jnp
from jax.experimental import pallas as pl
from jax.experimental.pallas import tpu as pltpu


# ----------------------------------------------------------------------------
# Pallas kernel: one fused matmul (both filters) + bias + sigmoid
# ----------------------------------------------------------------------------
def wavelet_kernel(x_ref, w_ref, b_ref, o_ref):
    # x_ref: (M, L)  rows = flattened (batch, channel) pairs, cols = seq axis
    # w_ref: (L, 2L) = [W_l^T | W_h^T]   (stacked filter banks)
    # b_ref: (1, 2L) = [b_l | b_h]
    # o_ref: (M, 2L) = sigmoid(x @ W_stacked + b)
    y = jnp.dot(x_ref[...], w_ref[...], preferred_element_type=jnp.float32)
    o_ref[...] = jax.nn.sigmoid(y + b_ref[...])


def wavelet_decomp_forward(x, w_stack_t, b_stack):
    """x: (B, L, C) f32.  Returns (l_out, h_out), each (B, L, C)."""
    B, L, C = x.shape
    M = B * C

    # Layout plumbing (outside the kernel): rows = (b, c) pairs, cols = seq axis.
    # This folds the batch into the MXU M-dim and makes the contraction a plain 2-D matmul.
    x2d = jnp.transpose(x, (0, 2, 1)).reshape(M, L)

    out2d = pl.pallas_call(
        wavelet_kernel,
        out_shape=jax.ShapeDtypeStruct((M, 2 * L), jnp.float32),
        grid=(1,),  # everything fits in VMEM at these sizes -> one block, one launch
        in_specs=[
            pl.BlockSpec((M, L), lambda i: (0, 0)),
            pl.BlockSpec((L, 2 * L), lambda i: (0, 0)),
            pl.BlockSpec((1, 2 * L), lambda i: (0, 0)),
        ],
        out_specs=pl.BlockSpec((M, 2 * L), lambda i: (0, 0)),
        compiler_params=pltpu.CompilerParams(dimension_semantics=("arbitrary",)),
    )(x2d, w_stack_t, b_stack)

    l2d, h2d = out2d[:, :L], out2d[:, L:]
    l_out = jnp.transpose(l2d.reshape(B, C, L), (0, 2, 1))
    h_out = jnp.transpose(h2d.reshape(B, C, L), (0, 2, 1))
    return l_out, h_out


# ----------------------------------------------------------------------------
# Parameter construction (mirrors wavelet_decomp.__init__ with wavelet=None)
# ----------------------------------------------------------------------------
H_FILTER = np.array([-0.0322, -0.0126, 0.0992, 0.2978, -0.8037, 0.49761, 0.0296, -0.0757],
                    dtype=np.float32)
L_FILTER = np.array([-0.0757, -0.0296, 0.4976, 0.8037, 0.2978, -0.0992, -0.0126, 0.0322],
                    dtype=np.float32)


def create_w(P, filt, key):
    """Replicates wavelet_decomp.create_W(P, is_l, is_comp=False)."""
    max_epsilon = float(np.min(np.abs(filt)))
    w = np.asarray(jax.random.normal(key, (P, P), jnp.float32)) * 0.1 * max_epsilon
    for i in range(P):
        filter_index = 0
        for j in range(i - 4, P):
            if j < 0:
                filter_index += 1
            elif filter_index < len(filt):
                w[i, j] = filt[filter_index]
                filter_index += 1
    return jnp.asarray(w, jnp.float32)


def init_params(key, seq_len):
    kwl, kwh, kbl, kbh = jax.random.split(key, 4)
    w_l = create_w(seq_len, L_FILTER, kwl)
    w_h = create_w(seq_len, H_FILTER, kwh)
    bound = 1.0 / math.sqrt(seq_len)  # nn.Linear default bias init range
    b_l = jax.random.uniform(kbl, (seq_len,), jnp.float32, -bound, bound)
    b_h = jax.random.uniform(kbh, (seq_len,), jnp.float32, -bound, bound)

    # Pre-pack for the fused kernel: one (L, 2L) weight and one (1, 2L) bias.
    w_stack_t = jnp.concatenate([w_l.T, w_h.T], axis=1)          # (L, 2L)
    b_stack = jnp.concatenate([b_l, b_h], axis=0).reshape(1, -1)  # (1, 2L)
    return dict(w_l=w_l, b_l=b_l, w_h=w_h, b_h=b_h,
                w_stack_t=w_stack_t, b_stack=b_stack)


# ----------------------------------------------------------------------------
# Pure-JAX reference (direct transcription of the PyTorch forward)
# ----------------------------------------------------------------------------
def wavelet_decomp_reference(x, w_l, b_l, w_h, b_h):
    xt = jnp.transpose(x, (0, 2, 1))                    # (B, C, L)
    h = jax.nn.sigmoid(xt @ w_h.T + b_h)                # Linear over seq axis
    l = jax.nn.sigmoid(xt @ w_l.T + b_l)
    return jnp.transpose(l, (0, 2, 1)), jnp.transpose(h, (0, 2, 1))


# ----------------------------------------------------------------------------
if __name__ == "__main__":
    B, seq_len, C = 2, 16, 8   # (batch, seq_len, channels) as the forward implies

    root = jax.random.PRNGKey(0)
    kx, kp = jax.random.split(root)
    x = jax.random.normal(kx, (B, seq_len, C), jnp.float32)
    params = init_params(kp, seq_len)

    l_out, h_out = wavelet_decomp_forward(x, params["w_stack_t"], params["b_stack"])
    l_out, h_out = jax.block_until_ready((l_out, h_out))

    l_ref, h_ref = wavelet_decomp_reference(x, params["w_l"], params["b_l"],
                                            params["w_h"], params["b_h"])

    assert l_out.shape == (B, seq_len, C) and h_out.shape == (B, seq_len, C)
    assert jnp.allclose(l_out, l_ref, atol=2e-3, rtol=2e-3), \
        float(jnp.max(jnp.abs(l_out - l_ref)))
    assert jnp.allclose(h_out, h_ref, atol=2e-3, rtol=2e-3), \
        float(jnp.max(jnp.abs(h_out - h_ref)))

    print("KERNEL_OK")
</pallas_src>

<mosaic_0001>
module attributes {stable_mosaic.version = 11 : i64} {
  func.func @wavelet_kernel(%arg0: i32, %arg1: memref<16x16xf32, #tpu.memory_space<vmem>>, %arg2: memref<16x32xf32, #tpu.memory_space<vmem>>, %arg3: memref<1x32xf32, #tpu.memory_space<vmem>>, %arg4: memref<16x32xf32, #tpu.memory_space<vmem>>) attributes {dimension_semantics = [#tpu.dimension_semantics<arbitrary>], iteration_bounds = array<i64: 1>, scalar_prefetch = 0 : i64, scratch_operands = 0 : i64, tpu.core_type = #tpu.core_type<tc>, window_params = [{pipeline_mode = #tpu.pipeline_mode<synchronous>, transform_indices = @transform_0, window_bounds = array<i64: 16, 16>}, {pipeline_mode = #tpu.pipeline_mode<synchronous>, transform_indices = @transform_1, window_bounds = array<i64: 16, 32>}, {pipeline_mode = #tpu.pipeline_mode<synchronous>, transform_indices = @transform_2, window_bounds = array<i64: 1, 32>}, {pipeline_mode = #tpu.pipeline_mode<synchronous>, transform_indices = @transform_3, window_bounds = array<i64: 16, 32>}]} {
    %c0 = arith.constant 0 : index
    %c0_0 = arith.constant 0 : index
    %0 = vector.load %arg1[%c0, %c0_0] : memref<16x16xf32, #tpu.memory_space<vmem>>, vector<16x16xf32>
    %c0_1 = arith.constant 0 : index
    %c0_2 = arith.constant 0 : index
    %1 = vector.load %arg2[%c0_1, %c0_2] : memref<16x32xf32, #tpu.memory_space<vmem>>, vector<16x32xf32>
    %cst = arith.constant dense<0.000000e+00> : vector<16x32xf32>
    %2 = tpu.matmul %0, %1, %cst {dimension_numbers = #tpu.dot_dimension_numbers<[1], [0], [0], [1], [0, 0, 1, 1], [], []>} : vector<16x16xf32>, vector<16x32xf32>, vector<16x32xf32> -> vector<16x32xf32>
    %c0_3 = arith.constant 0 : index
    %c0_4 = arith.constant 0 : index
    %3 = vector.load %arg3[%c0_3, %c0_4] : memref<1x32xf32, #tpu.memory_space<vmem>>, vector<1x32xf32>
    %4 = vector.broadcast %3 : vector<1x32xf32> to vector<16x32xf32>
    %5 = arith.addf %2, %4 : vector<16x32xf32>
    %6 = arith.negf %5 : vector<16x32xf32>
    %7 = math.exp %6 : vector<16x32xf32>
    %cst_5 = arith.constant 1.000000e+00 : f32
    %8 = vector.broadcast %cst_5 : f32 to vector<16x32xf32>
    %9 = arith.addf %8, %7 : vector<16x32xf32>
    %10 = arith.divf %8, %9 : vector<16x32xf32>
    %c0_6 = arith.constant 0 : index
    %c0_7 = arith.constant 0 : index
    %11 = vector.load %arg4[%c0_6, %c0_7] : memref<16x32xf32, #tpu.memory_space<vmem>>, vector<16x32xf32>
    tpu.vector_store %arg4[%c0_6, %c0_7], %10 {strides = array<i32>} : memref<16x32xf32, #tpu.memory_space<vmem>>, vector<16x32xf32>,
    return
  }
  func.func @transform_0(%arg0: i32) -> (i32, i32) {
    %c0_i32 = arith.constant 0 : i32
    %c0_i32_0 = arith.constant 0 : i32
    %c0_i32_1 = arith.constant 0 : i32
    return %c0_i32, %c0_i32_0 : i32, i32
  }
  func.func @transform_1(%arg0: i32) -> (i32, i32) {
    %c0_i32 = arith.constant 0 : i32
    %c0_i32_0 = arith.constant 0 : i32
    %c0_i32_1 = arith.constant 0 : i32
    return %c0_i32, %c0_i32_0 : i32, i32
  }
  func.func @transform_2(%arg0: i32) -> (i32, i32) {
    %c0_i32 = arith.constant 0 : i32
    %c0_i32_0 = arith.constant 0 : i32
    %c0_i32_1 = arith.constant 0 : i32
    return %c0_i32, %c0_i32_0 : i32, i32
  }
  func.func @transform_3(%arg0: i32) -> (i32, i32) {
    %c0_i32 = arith.constant 0 : i32
    %c0_i32_0 = arith.constant 0 : i32
    %c0_i32_1 = arith.constant 0 : i32
    return %c0_i32, %c0_i32_0 : i32, i32
  }
}

</mosaic_0001>

<llo_original>
// kernel: tpu_custom_call.1
$region0: #{tpu_custom_call.1}
  #allocation0 [shape = 'u32[]', space=smem, size = 0x4, offset = 0x4, fixed_abs, tag = 'smem constant byte address 0x4 - core index']
  #allocation1 [shape = 'u32[72,128]{1,0:T(1,128)}', space=vmem, size = 0x9000, scoped, tag = 'internal scratch']
  %s0 = inlined_call_operand.hbm [shape: f32[16,16], index: 0, kind: input, shape index: {}]
  %s1 = inlined_call_operand.hbm [shape: f32[16,32], index: 1, kind: input, shape index: {}]
  %s2 = inlined_call_operand.vmem [shape: f32[1,32], index: 2, kind: input, shape index: {}]
  %s3 = inlined_call_operand.hbm [shape: f32[16,32], index: 3, kind: output, shape index: {}]
  %s4 = sld [smem:[#allocation0]]
  $region30: #{tpu_custom_call.1} parent=0
    _
  %s6 = ssub.s32 1, %s4
  %s7 = scalar_select 0, %s6, %s4
  $region1: #{tpu_custom_call.1} parent=0
    #allocation2 [shape = 'u8[8192]{0}', space=vmem, size = 0x2000, scoped, tag = 'input window, operand 0, single buffered']
    #allocation3 [shape = 's32[1]{0}', space=sflag, size = 0x4, scoped, tag = 'scoped memory for tpu_custom_call.1']
    #allocation4 [shape = 's32[1]{0}', space=sflag, size = 0x4, scoped, tag = 'scoped memory for tpu_custom_call.1']
    #allocation5 [shape = 'u8[8192]{0}', space=vmem, size = 0x2000, scoped, tag = 'input window, operand 1, single buffered']
    #allocation6 [shape = 's32[1]{0}', space=sflag, size = 0x4, scoped, tag = 'scoped memory for tpu_custom_call.1']
    #allocation7 [shape = 'u8[8192]{0}', space=vmem, size = 0x2000, scoped, tag = 'output window, operand 0, single buffered']
    %8 = vsyncpa [#allocation3], 0
    %9 = vsyncpa [#allocation6], 0
    %10 = vsyncpa [#allocation4], 0
    // Predicated region
    $region2: #{tpu_custom_call.1} parent=1 // pred_check
      _
    $region3: #{tpu_custom_call.1} parent=1 // pred_check_branch
      %12 = sbr.rel (0) target = $region5
    $region4: #{tpu_custom_call.1} parent=1 // pred_region
      %14 = vsyncadd [#allocation3], 0
      %s15 = sshll.u32 %s0, 4
      %s16 = int_to_ptr.hbm [resolvable:$true] %s15
      %s17 = sshll.u32 [#allocation2], 4
      %s18 = int_to_ptr.vmem [resolvable:$true] %s17
      %23 = dma.hbm_to_vmem [thread:$0]  %s16, 256, %s18, [#allocation3], 128, 128, 8
    $region5: #{tpu_custom_call.1} parent=1 // pred_fallthru
      _
    // Predicated region
    $region6: #{tpu_custom_call.1} parent=1 // pred_check
      _
    $region7: #{tpu_custom_call.1} parent=1 // pred_check_branch
      %25 = sbr.rel (0) target = $region9
    $region8: #{tpu_custom_call.1} parent=1 // pred_region
      %27 = vsyncadd [#allocation6], 0
      %s28 = sshll.u32 %s1, 4
      %s29 = int_to_ptr.hbm [resolvable:$true] %s28
      %s30 = sshll.u32 [#allocation5], 4
      %s31 = int_to_ptr.vmem [resolvable:$true] %s30
      %36 = dma.hbm_to_vmem [thread:$0]  %s29, 256, %s31, [#allocation6], 128, 128, 8
    $region9: #{tpu_custom_call.1} parent=1 // pred_fallthru
      _
    // Predicated region
    $region10: #{tpu_custom_call.1} parent=1 // pred_check
      _
    $region11: #{tpu_custom_call.1} parent=1 // pred_check_branch
      %38 = sbr.rel (0) target = $region13
    $region12: #{tpu_custom_call.1} parent=1 // pred_region
      _
    $region13: #{tpu_custom_call.1} parent=1 // pred_fallthru
      _
    // Predicated region
    $region14: #{tpu_custom_call.1} parent=1 // pred_check
      _
    $region15: #{tpu_custom_call.1} parent=1 // pred_check_branch
      %40 = sbr.rel (0) target = $region17
    $region16: #{tpu_custom_call.1} parent=1 // pred_region
      %42 = dma.done [#allocation3], 256
    $region17: #{tpu_custom_call.1} parent=1 // pred_fallthru
      _
    // Predicated region
    $region18: #{tpu_custom_call.1} parent=1 // pred_check
      _
    $region19: #{tpu_custom_call.1} parent=1 // pred_check_branch
      %44 = sbr.rel (0) target = $region21
    $region20: #{tpu_custom_call.1} parent=1 // pred_region
      %46 = dma.done [#allocation6], 256
    $region21: #{tpu_custom_call.1} parent=1 // pred_fallthru
      _
    %v47 = vld [vmem:[#allocation2] sm:$0xff]
    %v48 = vld [vmem:[#allocation2 + $0x8] sm:$0xff]
    %v49 = vld [vmem:[#allocation5] sm:$0xff]
    %v50 = vld [vmem:[#allocation5 + $0x8] sm:$0xff]
    %v51 = vld [vmem:[%s2] sm:$0x1]
    %v53 = vperm.slane %v51, 0
    %vm55 = vcmask 130048
    %v57 = vsel %vm55, %v47, 0
    %v60 = vsel %vm55, %v48, 0
    %62 = vmatpush.msra.mxu0 0.0
    %63 = vmatpush.msra.mxu0 0.0
    %64 = vmatpush.msra.mxu0 0.0
    %65 = vmatpush.msra.mxu0 0.0
    %66 = vmatpush.msra.mxu0 0.0
    %67 = vmatpush.msra.mxu0 0.0
    %68 = vmatpush.msra.mxu0 0.0
    %69 = vmatpush.msra.mxu0 0.0
    %70 = vmatpush.msra.mxu0 0.0
    %71 = vmatpush.msra.mxu0 0.0
    %72 = vmatpush.msra.mxu0 0.0
    %73 = vmatpush.msra.mxu0 0.0
    %74 = vmatpush.msra.mxu0 0.0
    %75 = vmatpush.msra.mxu0 0.0
    %76 = vmatpush.msra.mxu0 %v50
    %77 = vmatpush.msra.mxu0 %v49
    %78 = vmatmul.f32.gmra.mxu0 %v57
    %v79 = vpop.f32.mrf.mxu0
    %v80 = vadd.f32 %v53, %v79
    %81 = vmatmul.f32.gmra.mxu0 %v60
    %v82 = vpop.f32.mrf.mxu0
    %v83 = vadd.f32 %v53, %v82
    %84 = vdwg.mxu0
    %v85 = vxor.u32 %v80, 2147483648
    %v86 = vxor.u32 %v83, 2147483648
    %v87 = vmul.f32 %v85, 1.442695
    %v88 = vpow.pop %v87
    %v89 = vmul.f32 %v86, 1.442695
    %v90 = vpow.pop %v89
    %v91 = vadd.f32 %v88, 1.0
    %v92 = vadd.f32 %v90, 1.0
    %v93 = vrcp.pop %v91
    %v94 = vmul.f32 %v91, %v93
    %v95 = vsub.f32 1.0, %v94
    %v96 = vmul.f32 %v93, %v95
    %v97 = vadd.f32 %v93, %v96
    %vm98 = vweird.f32 %v91
    %vm99 = vweird.f32 %v93
    %vm100 = vmor %vm98, %vm99
    %v101 = vsel %vm100, %v93, %v97
    %v102 = vand.u32 2147483647, %v91
    %vm103 = vcmp.eq.f32.partialorder %v102, 8.507059e+37
    %v104 = vand.u32 %v91, 2147483648
    %v105 = vor.u32 1.1754944e-38, %v104
    %v106 = vsel %vm103, %v105, %v101
    %v107 = vmul.f32 1.0, %v106
    %v108 = vrcp.pop %v92
    %v109 = vmul.f32 %v92, %v108
    %v110 = vsub.f32 1.0, %v109
    %v111 = vmul.f32 %v108, %v110
    %v112 = vadd.f32 %v108, %v111
    %vm113 = vweird.f32 %v92
    %vm114 = vweird.f32 %v108
    %vm115 = vmor %vm113, %vm114
    %v116 = vsel %vm115, %v108, %v112
    %v117 = vand.u32 2147483647, %v92
    %vm118 = vcmp.eq.f32.partialorder %v117, 8.507059e+37
    %v119 = vand.u32 %v92, 2147483648
    %v120 = vor.u32 1.1754944e-38, %v119
    %v121 = vsel %vm118, %v120, %v116
    %v122 = vmul.f32 1.0, %v121
    %vm123 = vcmask 261120
    %124 = vst.msk [vmem:[#allocation7] sm:$0xff] %vm123, %v107
    %125 = vst.msk [vmem:[#allocation7 + $0x8] sm:$0xff] %vm123, %v122
    // Predicated region
    $region22: #{tpu_custom_call.1} parent=1 // pred_check
      _
    $region23: #{tpu_custom_call.1} parent=1 // pred_check_branch
      %127 = sbr.rel (0) target = $region25
    $region24: #{tpu_custom_call.1} parent=1 // pred_region
      %129 = vsyncadd [#allocation4], 0
      %s130 = sshll.u32 [#allocation7], 4
      %s131 = int_to_ptr.vmem [resolvable:$true] %s130
      %s132 = sshll.u32 %s3, 4
      %s133 = int_to_ptr.hbm [resolvable:$true] %s132
      %138 = dma.vmem_to_hbm [thread:$0]  %s131, 256, %s133, [#allocation4], 128, 128, 8
    $region25: #{tpu_custom_call.1} parent=1 // pred_fallthru
      _
    // Predicated region
    $region26: #{tpu_custom_call.1} parent=1 // pred_check
      _
    $region27: #{tpu_custom_call.1} parent=1 // pred_check_branch
      %140 = sbr.rel (0) target = $region29
    $region28: #{tpu_custom_call.1} parent=1 // pred_region
      %142 = dma.done [#allocation4], 256
    $region29: #{tpu_custom_call.1} parent=1 // pred_fallthru
      _
    %143 = vsyncpa [#allocation3], 1
    %144 = vsyncpa [#allocation6], 1
    %145 = vsyncpa [#allocation4], 1

</llo_original>
